<compile_context>
chip_gen: v5e
topology: v5e:2x2
jax: 0.10.0
libtpu: 0.0.40
codegen_flags: <defaults>
</compile_context>

<pallas_src>
import jax
import jax.numpy as jnp
from jax.experimental import pallas as pl
from jax.experimental.pallas import tpu as pltpu

# ---- model hyperparameters (small, consistent with the module) -------------
EMBED = 32     # embed_size (kept small; the original file uses 250)
C_OUT = 3      # Conv1d out_channels
KSIZE = 4      # Conv1d kernel_size (stride 1)
POOL_K = 3     # MaxPool1d kernel
POOL_S = 2     # MaxPool1d stride


def model_kernel(x_ref, w_ref, p_ref, out_ref):
    """Whole forward pass, single invocation.

    x_ref  : (B, L, E)  bf16  input sequence (no im2col; windows sliced here)
    w_ref  : (K, C, E)  bf16  conv weight, lane-dense in E (w[k,c,e] = W[c,e,k])
    p_ref  : (8, 128)   f32   packed params: [0,:C]=conv bias,
                              [1,:C]=linear weight, [2,0]=linear bias
    out_ref: (B, 1)     f32   sigmoid(logit)
    """
    B, L, E = x_ref.shape
    K, C, _ = w_ref.shape
    l_out = L - K + 1                          # conv output length
    l_pool = (l_out - POOL_K) // POOL_S + 1    # maxpool output length
    l_cov = (l_pool - 1) * POOL_S + POOL_K     # conv rows covered by pooling

    x = x_ref[...]                             # (B, L, E) bf16
    w = w_ref[...]                             # (K, C, E) bf16
    p = p_ref[...]                             # (8, 128)  f32

    # ---- Conv1d: K shifted batched dots, f32 accumulation on the MXU --------
    def tap(k):
        wk = jnp.broadcast_to(w[k][None, :, :], (B, C, E))          # (B, C, E)
        return jnp.einsum('ble,bce->blc', x[:, k:k + l_cov, :], wk,
                          preferred_element_type=jnp.float32)       # (B, l_cov, C)

    conv = tap(0)
    for k in range(1, K):                      # static unroll, K = 4
        conv = conv + tap(k)

    # ---- maxpool(3,2) + ReLU + global max over time --------------------------
    # == relu(max over the pool-covered conv rows); the conv bias commutes with
    # the max, so it is added once per (B, C).
    m = jnp.max(conv, axis=1)                                        # (B, C)
    feat = jnp.maximum(m + p[0:1, 0:C], 0.0)                         # (B, C)

    # ---- Linear(3 -> 1) + exact Sigmoid (single EUP tanh) --------------------
    logit = jnp.sum(feat * p[1:2, 0:C], axis=1, keepdims=True) + p[2:3, 0:1]
    out_ref[...] = (0.5 * jnp.tanh(0.5 * logit) + 0.5).astype(out_ref.dtype)


def model_forward(x, conv_w, conv_b, lin_w, lin_b):
    """Layout prep (bf16 casts + one tiny packed-param tile) + pallas_call."""
    B, L, E = x.shape
    C, E_w, K = conv_w.shape
    assert (C, E_w, K) == (C_OUT, E, KSIZE)
    assert L - K + 1 >= POOL_K, "sequence too short for conv + maxpool"

    # bf16 MXU operands; f32 accumulation & epilogue inside the kernel.
    x_bf = x.astype(jnp.bfloat16)                                   # (B, L, E)
    w_bf = jnp.transpose(conv_w, (2, 0, 1)).astype(jnp.bfloat16)    # (K, C, E)

    # All tiny params in a single (8, 128) f32 VMEM tile (one small DMA).
    params = jnp.zeros((8, 128), jnp.float32)
    params = params.at[0, :C_OUT].set(conv_b)
    params = params.at[1, :C_OUT].set(lin_w.reshape(-1))
    params = params.at[2, 0].set(lin_b[0])

    vmem = pl.BlockSpec(memory_space=pltpu.MemorySpace.VMEM)
    return pl.pallas_call(
        model_kernel,
        out_shape=jax.ShapeDtypeStruct((B, 1), jnp.float32),
        in_specs=[vmem, vmem, vmem],
        out_specs=vmem,
    )(x_bf, w_bf, params)


def model_reference(x, conv_w, conv_b, lin_w, lin_b):
    """Pure-JAX reference mirroring the PyTorch forward pass.

    The conv matmul operands are rounded to bf16 exactly like the kernel's MXU
    data path (accumulation and everything downstream is f32 in both), so the
    comparison stays tight while exercising the recommended bf16 input path.
    """
    xq = x.astype(jnp.bfloat16).astype(jnp.float32)
    wq = conv_w.astype(jnp.bfloat16).astype(jnp.float32)
    B, L, E = x.shape
    l_out = L - KSIZE + 1
    conv = jnp.zeros((B, l_out, C_OUT), jnp.float32)
    for k in range(KSIZE):
        conv = conv + jnp.einsum('ble,ce->blc', xq[:, k:k + l_out, :], wq[:, :, k])
    conv = conv + conv_b[None, None, :]
    l_pool = (l_out - POOL_K) // POOL_S + 1
    pooled = jnp.stack(
        [conv[:, POOL_S * p:POOL_S * p + POOL_K, :].max(axis=1) for p in range(l_pool)],
        axis=1)                                          # (B, l_pool, C)
    feat = jnp.maximum(pooled, 0.0).max(axis=1)          # (B, C)
    logit = feat @ lin_w.T + lin_b[None, :]              # (B, 1)
    return jax.nn.sigmoid(logit)


if __name__ == "__main__":
    key = jax.random.PRNGKey(0)
    kx, kw1, kb1, kw2, kb2 = jax.random.split(key, 5)

    B, L = 2, 16                                           # batch, sequence length
    x = jax.random.normal(kx, (B, L, EMBED), jnp.float32)  # layout: (B, L, E)

    # Deterministic parameter init (shapes match the torch module).
    bnd_c = 1.0 / jnp.sqrt(jnp.float32(EMBED * KSIZE))
    bnd_l = 1.0 / jnp.sqrt(jnp.float32(C_OUT))
    conv_w = jax.random.uniform(kw1, (C_OUT, EMBED, KSIZE), jnp.float32, -bnd_c, bnd_c)
    conv_b = jax.random.uniform(kb1, (C_OUT,), jnp.float32, -bnd_c, bnd_c)
    lin_w = jax.random.uniform(kw2, (1, C_OUT), jnp.float32, -bnd_l, bnd_l)
    lin_b = jax.random.uniform(kb2, (1,), jnp.float32, -bnd_l, bnd_l)

    out = jax.block_until_ready(model_forward(x, conv_w, conv_b, lin_w, lin_b))
    ref = model_reference(x, conv_w, conv_b, lin_w, lin_b)

    assert out.shape == (B, 1)
    assert jnp.allclose(out, ref, atol=1e-4, rtol=1e-4), (out, ref)
    print("KERNEL_OK")
</pallas_src>

<mosaic_0001>
module attributes {stable_mosaic.version = 11 : i64} {
  func.func @model_kernel(%arg0: memref<2x16x32xbf16, #tpu.memory_space<vmem>>, %arg1: memref<4x3x32xbf16, #tpu.memory_space<vmem>>, %arg2: memref<8x128xf32, #tpu.memory_space<vmem>>, %arg3: memref<2x1xf32, #tpu.memory_space<vmem>>) attributes {dimension_semantics = [], scalar_prefetch = 0 : i64, scratch_operands = 0 : i64, tpu.core_type = #tpu.core_type<tc>} {
    %c0 = arith.constant 0 : index
    %c0_0 = arith.constant 0 : index
    %c0_1 = arith.constant 0 : index
    %0 = vector.load %arg0[%c0, %c0_0, %c0_1] : memref<2x16x32xbf16, #tpu.memory_space<vmem>>, vector<2x16x32xbf16>
    %c0_2 = arith.constant 0 : index
    %c0_3 = arith.constant 0 : index
    %c0_4 = arith.constant 0 : index
    %1 = vector.load %arg1[%c0_2, %c0_3, %c0_4] : memref<4x3x32xbf16, #tpu.memory_space<vmem>>, vector<4x3x32xbf16>
    %c0_5 = arith.constant 0 : index
    %c0_6 = arith.constant 0 : index
    %2 = vector.load %arg2[%c0_5, %c0_6] : memref<8x128xf32, #tpu.memory_space<vmem>>, vector<8x128xf32>
    %3 = vector.extract_strided_slice %1 {offsets = [0, 0, 0], sizes = [1, 3, 32], strides = [1, 1, 1]} : vector<4x3x32xbf16> to vector<1x3x32xbf16>
    %4 = vector.shape_cast %3 : vector<1x3x32xbf16> to vector<3x32xbf16>
    %5 = vector.shape_cast %4 : vector<3x32xbf16> to vector<1x3x32xbf16>
    %6 = vector.shape_cast %5 : vector<1x3x32xbf16> to vector<1x3x32xbf16>
    %7 = vector.broadcast %6 : vector<1x3x32xbf16> to vector<2x3x32xbf16>
    %8 = vector.extract_strided_slice %0 {offsets = [0, 0, 0], sizes = [2, 13, 32], strides = [1, 1, 1]} : vector<2x16x32xbf16> to vector<2x13x32xbf16>
    "tpu.trace_start"() <{level = 10 : i32, message = "ble,bce->blc"}> : () -> ()
    %cst = arith.constant dense<0.000000e+00> : vector<2x13x3xf32>
    %9 = tpu.matmul %8, %7, %cst {dimension_numbers = #tpu.dot_dimension_numbers<[2], [2], [1], [1], [0, 0, 0, 1, 1, 1], [0], [0]>} : vector<2x13x32xbf16>, vector<2x3x32xbf16>, vector<2x13x3xf32> -> vector<2x13x3xf32>
    "tpu.trace_stop"() : () -> ()
    %10 = vector.extract_strided_slice %1 {offsets = [1, 0, 0], sizes = [1, 3, 32], strides = [1, 1, 1]} : vector<4x3x32xbf16> to vector<1x3x32xbf16>
    %11 = vector.shape_cast %10 : vector<1x3x32xbf16> to vector<3x32xbf16>
    %12 = vector.shape_cast %11 : vector<3x32xbf16> to vector<1x3x32xbf16>
    %13 = vector.shape_cast %12 : vector<1x3x32xbf16> to vector<1x3x32xbf16>
    %14 = vector.broadcast %13 : vector<1x3x32xbf16> to vector<2x3x32xbf16>
    %15 = vector.extract_strided_slice %0 {offsets = [0, 1, 0], sizes = [2, 13, 32], strides = [1, 1, 1]} : vector<2x16x32xbf16> to vector<2x13x32xbf16>
    "tpu.trace_start"() <{level = 10 : i32, message = "ble,bce->blc"}> : () -> ()
    %cst_7 = arith.constant dense<0.000000e+00> : vector<2x13x3xf32>
    %16 = tpu.matmul %15, %14, %cst_7 {dimension_numbers = #tpu.dot_dimension_numbers<[2], [2], [1], [1], [0, 0, 0, 1, 1, 1], [0], [0]>} : vector<2x13x32xbf16>, vector<2x3x32xbf16>, vector<2x13x3xf32> -> vector<2x13x3xf32>
    "tpu.trace_stop"() : () -> ()
    %17 = arith.addf %9, %16 : vector<2x13x3xf32>
    %18 = vector.extract_strided_slice %1 {offsets = [2, 0, 0], sizes = [1, 3, 32], strides = [1, 1, 1]} : vector<4x3x32xbf16> to vector<1x3x32xbf16>
    %19 = vector.shape_cast %18 : vector<1x3x32xbf16> to vector<3x32xbf16>
    %20 = vector.shape_cast %19 : vector<3x32xbf16> to vector<1x3x32xbf16>
    %21 = vector.shape_cast %20 : vector<1x3x32xbf16> to vector<1x3x32xbf16>
    %22 = vector.broadcast %21 : vector<1x3x32xbf16> to vector<2x3x32xbf16>
    %23 = vector.extract_strided_slice %0 {offsets = [0, 2, 0], sizes = [2, 13, 32], strides = [1, 1, 1]} : vector<2x16x32xbf16> to vector<2x13x32xbf16>
    "tpu.trace_start"() <{level = 10 : i32, message = "ble,bce->blc"}> : () -> ()
    %cst_8 = arith.constant dense<0.000000e+00> : vector<2x13x3xf32>
    %24 = tpu.matmul %23, %22, %cst_8 {dimension_numbers = #tpu.dot_dimension_numbers<[2], [2], [1], [1], [0, 0, 0, 1, 1, 1], [0], [0]>} : vector<2x13x32xbf16>, vector<2x3x32xbf16>, vector<2x13x3xf32> -> vector<2x13x3xf32>
    "tpu.trace_stop"() : () -> ()
    %25 = arith.addf %17, %24 : vector<2x13x3xf32>
    %26 = vector.extract_strided_slice %1 {offsets = [3, 0, 0], sizes = [1, 3, 32], strides = [1, 1, 1]} : vector<4x3x32xbf16> to vector<1x3x32xbf16>
    %27 = vector.shape_cast %26 : vector<1x3x32xbf16> to vector<3x32xbf16>
    %28 = vector.shape_cast %27 : vector<3x32xbf16> to vector<1x3x32xbf16>
    %29 = vector.shape_cast %28 : vector<1x3x32xbf16> to vector<1x3x32xbf16>
    %30 = vector.broadcast %29 : vector<1x3x32xbf16> to vector<2x3x32xbf16>
    %31 = vector.extract_strided_slice %0 {offsets = [0, 3, 0], sizes = [2, 13, 32], strides = [1, 1, 1]} : vector<2x16x32xbf16> to vector<2x13x32xbf16>
    "tpu.trace_start"() <{level = 10 : i32, message = "ble,bce->blc"}> : () -> ()
    %cst_9 = arith.constant dense<0.000000e+00> : vector<2x13x3xf32>
    %32 = tpu.matmul %31, %30, %cst_9 {dimension_numbers = #tpu.dot_dimension_numbers<[2], [2], [1], [1], [0, 0, 0, 1, 1, 1], [0], [0]>} : vector<2x13x32xbf16>, vector<2x3x32xbf16>, vector<2x13x3xf32> -> vector<2x13x3xf32>
    "tpu.trace_stop"() : () -> ()
    %33 = arith.addf %25, %32 : vector<2x13x3xf32>
    %cst_10 = arith.constant dense<0xFF800000> : vector<2x3xf32>
    %34 = vector.multi_reduction <maximumf>, %33, %cst_10 [1] : vector<2x13x3xf32> to vector<2x3xf32>
    %35 = vector.extract_strided_slice %2 {offsets = [0, 0], sizes = [1, 3], strides = [1, 1]} : vector<8x128xf32> to vector<1x3xf32>
    %36 = vector.broadcast %35 : vector<1x3xf32> to vector<2x3xf32>
    %37 = arith.addf %34, %36 : vector<2x3xf32>
    %cst_11 = arith.constant 0.000000e+00 : f32
    %38 = vector.broadcast %cst_11 : f32 to vector<2x3xf32>
    %39 = arith.maximumf %37, %38 : vector<2x3xf32>
    %40 = vector.extract_strided_slice %2 {offsets = [1, 0], sizes = [1, 3], strides = [1, 1]} : vector<8x128xf32> to vector<1x3xf32>
    %41 = vector.broadcast %40 : vector<1x3xf32> to vector<2x3xf32>
    %42 = arith.mulf %39, %41 : vector<2x3xf32>
    %cst_12 = arith.constant dense<0.000000e+00> : vector<2xf32>
    %43 = vector.multi_reduction <add>, %42, %cst_12 [1] : vector<2x3xf32> to vector<2xf32>
    %44 = vector.shape_cast %43 : vector<2xf32> to vector<2x1xf32>
    %45 = vector.extract_strided_slice %2 {offsets = [2, 0], sizes = [1, 1], strides = [1, 1]} : vector<8x128xf32> to vector<1x1xf32>
    %46 = vector.broadcast %45 : vector<1x1xf32> to vector<2x1xf32>
    %47 = arith.addf %44, %46 : vector<2x1xf32>
    %cst_13 = arith.constant 5.000000e-01 : f32
    %48 = vector.broadcast %cst_13 : f32 to vector<2x1xf32>
    %49 = arith.mulf %48, %47 : vector<2x1xf32>
    %50 = math.tanh %49 : vector<2x1xf32>
    %cst_14 = arith.constant 5.000000e-01 : f32
    %51 = vector.broadcast %cst_14 : f32 to vector<2x1xf32>
    %52 = arith.mulf %51, %50 : vector<2x1xf32>
    %cst_15 = arith.constant 5.000000e-01 : f32
    %53 = vector.broadcast %cst_15 : f32 to vector<2x1xf32>
    %54 = arith.addf %52, %53 : vector<2x1xf32>
    %c0_16 = arith.constant 0 : index
    %c0_17 = arith.constant 0 : index
    %55 = vector.load %arg3[%c0_16, %c0_17] : memref<2x1xf32, #tpu.memory_space<vmem>>, vector<2x1xf32>
    tpu.vector_store %arg3[%c0_16, %c0_17], %54 {strides = array<i32>} : memref<2x1xf32, #tpu.memory_space<vmem>>, vector<2x1xf32>,
    return
  }
}

</mosaic_0001>

<llo_original>
// kernel: tpu_custom_call.1
$region0: #{tpu_custom_call.1}
  #allocation0 [shape = 'u32[]', space=smem, size = 0x4, offset = 0x4, fixed_abs, tag = 'smem constant byte address 0x4 - core index']
  #allocation1 [shape = 'u32[72,128]{1,0:T(1,128)}', space=vmem, size = 0x9000, scoped, tag = 'internal scratch']
  %s0 = inlined_call_operand.hbm [shape: bf16[2,16,32], index: 0, kind: input, shape index: {}]
  %s1 = inlined_call_operand.vmem [shape: bf16[4,3,32], index: 1, kind: input, shape index: {}]
  %s2 = inlined_call_operand.vmem [shape: f32[8,128], index: 2, kind: input, shape index: {}]
  %s3 = inlined_call_operand.vmem [shape: f32[2,1], index: 3, kind: output, shape index: {}]
  %s4 = sld [smem:[#allocation0]]
  $region26: #{tpu_custom_call.1} parent=0
    _
  %s6 = ssub.s32 1, %s4
  %s7 = scalar_select 0, %s6, %s4
  $region1: #{tpu_custom_call.1} parent=0
    #allocation2 [shape = 'u8[8192]{0}', space=vmem, size = 0x2000, scoped, tag = 'input window, operand 0, single buffered']
    #allocation3 [shape = 's32[1]{0}', space=sflag, size = 0x4, scoped, tag = 'scoped memory for tpu_custom_call.1']
    %8 = vsyncpa [#allocation3], 0
    // Predicated region
    $region2: #{tpu_custom_call.1} parent=1 // pred_check
      _
    $region3: #{tpu_custom_call.1} parent=1 // pred_check_branch
      %10 = sbr.rel (0) target = $region5
    $region4: #{tpu_custom_call.1} parent=1 // pred_region
      %12 = vsyncadd [#allocation3], 0
      %s13 = sshll.u32 %s0, 4
      %s14 = int_to_ptr.hbm [resolvable:$true] %s13
      %s15 = sshll.u32 [#allocation2], 4
      %s16 = int_to_ptr.vmem [resolvable:$true] %s15
      %21 = dma.hbm_to_vmem [thread:$0]  %s14, 256, %s16, [#allocation3], 64, 64, 4
    $region5: #{tpu_custom_call.1} parent=1 // pred_fallthru
      _
    // Predicated region
    $region6: #{tpu_custom_call.1} parent=1 // pred_check
      _
    $region7: #{tpu_custom_call.1} parent=1 // pred_check_branch
      %23 = sbr.rel (0) target = $region9
    $region8: #{tpu_custom_call.1} parent=1 // pred_region
      _
    $region9: #{tpu_custom_call.1} parent=1 // pred_fallthru
      _
    // Predicated region
    $region10: #{tpu_custom_call.1} parent=1 // pred_check
      _
    $region11: #{tpu_custom_call.1} parent=1 // pred_check_branch
      %25 = sbr.rel (0) target = $region13
    $region12: #{tpu_custom_call.1} parent=1 // pred_region
      _
    $region13: #{tpu_custom_call.1} parent=1 // pred_fallthru
      _
    // Predicated region
    $region14: #{tpu_custom_call.1} parent=1 // pred_check
      _
    $region15: #{tpu_custom_call.1} parent=1 // pred_check_branch
      %27 = sbr.rel (0) target = $region17
    $region16: #{tpu_custom_call.1} parent=1 // pred_region
      %29 = dma.done [#allocation3], 256
    $region17: #{tpu_custom_call.1} parent=1 // pred_fallthru
      _
    %v31 = vld [vmem:[#allocation2] sm:$0xf]
    %v32 = vld [vmem:[#allocation2 + $0x4] sm:$0xf]
    %v33 = vld [vmem:[#allocation2 + $0x8] sm:$0xf]
    %v34 = vld [vmem:[#allocation2 + $0xc] sm:$0xf]
    %v35 = vld [vmem:[%s1] sm:$0x3]
    %v36 = vld [vmem:[%s1 + $0x2] sm:$0x3]
    %v37 = vld [vmem:[%s1 + $0x4] sm:$0x3]
    %v38 = vld [vmem:[%s1 + $0x6] sm:$0x3]
    %v39 = vld [vmem:[%s2] sm:$0xff]
    %v42 = vunpack.c.l.b16 %v31
    %v43 = vunpack.c.l.b16 %v32
    %v44 = vpack.c.b16 %v43, %v42
    %v46 = vshrl.u32 %v44, 16
    %v48 = vshll.u32 %v44, 16
    %v50 = vrot.slane %v48, 1
    %v51 = vor.u32 %v46, %v50
    %vm52 = vcmask 261120
    %v54 = vsel %vm52, %v51, 0
    %v57 = vsel %vm52, %v36, 0
    %59 = vmatpush.bf16.xpose.msra.mxu0 0
    %60 = vmatpush.bf16.xpose.msra.mxu0 0
    %61 = vmatpush.bf16.xpose.msra.mxu0 0
    %62 = vmatpush.bf16.xpose.msra.mxu0 0
    %63 = vmatpush.bf16.xpose.msra.mxu0 0
    %64 = vmatpush.bf16.xpose.msra.mxu0 0
    %65 = vmatpush.bf16.xpose.msra.mxu0 0
    %66 = vmatpush.bf16.xpose.msra.mxu0 %v57
    %67 = vmatmul.bf16.gmra.mxu0 %v54
    %v68 = vpop.f32.mrf.mxu0
    %v69 = vadd.f32 0.0, %v68
    %v70 = vpop.f32.mrf.mxu0
    %v71 = vadd.f32 0.0, %v70
    %72 = vdwg.mxu0
    %v75 = vunpack.c.l.b16 %v33
    %v76 = vunpack.c.l.b16 %v34
    %v77 = vpack.c.b16 %v76, %v75
    %v79 = vshrl.u32 %v77, 16
    %v81 = vshll.u32 %v77, 16
    %v83 = vrot.slane %v81, 1
    %v84 = vor.u32 %v79, %v83
    %v86 = vsel %vm52, %v84, 0
    %88 = vmatpush.bf16.xpose.msra.mxu0 0
    %89 = vmatpush.bf16.xpose.msra.mxu0 0
    %90 = vmatpush.bf16.xpose.msra.mxu0 0
    %91 = vmatpush.bf16.xpose.msra.mxu0 0
    %92 = vmatpush.bf16.xpose.msra.mxu0 0
    %93 = vmatpush.bf16.xpose.msra.mxu0 0
    %94 = vmatpush.bf16.xpose.msra.mxu0 0
    %95 = vmatpush.bf16.xpose.msra.mxu0 %v57
    %96 = vmatmul.bf16.gmra.mxu0 %v86
    %v97 = vpop.f32.mrf.mxu0
    %v98 = vadd.f32 0.0, %v97
    %v99 = vpop.f32.mrf.mxu0
    %v100 = vadd.f32 0.0, %v99
    %101 = vdwg.mxu0
    %v102 = vsel %vm52, %v44, 0
    %v105 = vsel %vm52, %v35, 0
    %107 = vmatpush.bf16.xpose.msra.mxu0 0
    %108 = vmatpush.bf16.xpose.msra.mxu0 0
    %109 = vmatpush.bf16.xpose.msra.mxu0 0
    %110 = vmatpush.bf16.xpose.msra.mxu0 0
    %111 = vmatpush.bf16.xpose.msra.mxu0 0
    %112 = vmatpush.bf16.xpose.msra.mxu0 0
    %113 = vmatpush.bf16.xpose.msra.mxu0 0
    %114 = vmatpush.bf16.xpose.msra.mxu0 %v105
    %115 = vmatmul.bf16.gmra.mxu0 %v102
    %v116 = vpop.f32.mrf.mxu0
    %v117 = vadd.f32 %v69, %v116
    %v118 = vpop.f32.mrf.mxu0
    %v119 = vadd.f32 %v71, %v118
    %120 = vdwg.mxu0
    %v121 = vsel %vm52, %v77, 0
    %123 = vmatpush.bf16.xpose.msra.mxu0 0
    %124 = vmatpush.bf16.xpose.msra.mxu0 0
    %125 = vmatpush.bf16.xpose.msra.mxu0 0
    %126 = vmatpush.bf16.xpose.msra.mxu0 0
    %127 = vmatpush.bf16.xpose.msra.mxu0 0
    %128 = vmatpush.bf16.xpose.msra.mxu0 0
    %129 = vmatpush.bf16.xpose.msra.mxu0 0
    %130 = vmatpush.bf16.xpose.msra.mxu0 %v105
    %131 = vmatmul.bf16.gmra.mxu0 %v121
    %v132 = vpop.f32.mrf.mxu0
    %v133 = vadd.f32 %v98, %v132
    %v134 = vpop.f32.mrf.mxu0
    %v135 = vadd.f32 %v100, %v134
    %136 = vdwg.mxu0
    %v137 = vrot.slane %v44, 1
    %v139 = vsel %vm52, %v137, 0
    %v142 = vsel %vm52, %v37, 0
    %144 = vmatpush.bf16.xpose.msra.mxu0 0
    %145 = vmatpush.bf16.xpose.msra.mxu0 0
    %146 = vmatpush.bf16.xpose.msra.mxu0 0
    %147 = vmatpush.bf16.xpose.msra.mxu0 0
    %148 = vmatpush.bf16.xpose.msra.mxu0 0
    %149 = vmatpush.bf16.xpose.msra.mxu0 0
    %150 = vmatpush.bf16.xpose.msra.mxu0 0
    %151 = vmatpush.bf16.xpose.msra.mxu0 %v142
    %152 = vmatmul.bf16.gmra.mxu0 %v139
    %v153 = vpop.f32.mrf.mxu0
    %v154 = vadd.f32 0.0, %v153
    %v155 = vpop.f32.mrf.mxu0
    %v156 = vadd.f32 0.0, %v155
    %157 = vdwg.mxu0
    %v158 = vrot.slane %v77, 1
    %v160 = vsel %vm52, %v158, 0
    %162 = vmatpush.bf16.xpose.msra.mxu0 0
    %163 = vmatpush.bf16.xpose.msra.mxu0 0
    %164 = vmatpush.bf16.xpose.msra.mxu0 0
    %165 = vmatpush.bf16.xpose.msra.mxu0 0
    %166 = vmatpush.bf16.xpose.msra.mxu0 0
    %167 = vmatpush.bf16.xpose.msra.mxu0 0
    %168 = vmatpush.bf16.xpose.msra.mxu0 0
    %169 = vmatpush.bf16.xpose.msra.mxu0 %v142
    %170 = vmatmul.bf16.gmra.mxu0 %v160
    %v171 = vpop.f32.mrf.mxu0
    %v172 = vadd.f32 0.0, %v171
    %v173 = vpop.f32.mrf.mxu0
    %v174 = vadd.f32 0.0, %v173
    %175 = vdwg.mxu0
    %v176 = vadd.f32 %v117, %v154
    %v177 = vadd.f32 %v119, %v156
    %v178 = vadd.f32 %v133, %v172
    %v179 = vadd.f32 %v135, %v174
    %v180 = vrot.slane %v46, 1
    %v181 = vrot.slane %v48, 2
    %v182 = vor.u32 %v180, %v181
    %v184 = vsel %vm52, %v182, 0
    %v187 = vsel %vm52, %v38, 0
    %189 = vmatpush.bf16.xpose.msra.mxu0 0
    %190 = vmatpush.bf16.xpose.msra.mxu0 0
    %191 = vmatpush.bf16.xpose.msra.mxu0 0
    %192 = vmatpush.bf16.xpose.msra.mxu0 0
    %193 = vmatpush.bf16.xpose.msra.mxu0 0
    %194 = vmatpush.bf16.xpose.msra.mxu0 0
    %195 = vmatpush.bf16.xpose.msra.mxu0 0
    %196 = vmatpush.bf16.xpose.msra.mxu0 %v187
    %197 = vmatmul.bf16.gmra.mxu0 %v184
    %v198 = vpop.f32.mrf.mxu0
    %v199 = vadd.f32 0.0, %v198
    %v200 = vpop.f32.mrf.mxu0
    %v201 = vadd.f32 0.0, %v200
    %202 = vdwg.mxu0
    %v203 = vrot.slane %v79, 1
    %v204 = vrot.slane %v81, 2
    %v205 = vor.u32 %v203, %v204
    %v207 = vsel %vm52, %v205, 0
    %209 = vmatpush.bf16.xpose.msra.mxu0 0
    %210 = vmatpush.bf16.xpose.msra.mxu0 0
    %211 = vmatpush.bf16.xpose.msra.mxu0 0
    %212 = vmatpush.bf16.xpose.msra.mxu0 0
    %213 = vmatpush.bf16.xpose.msra.mxu0 0
    %214 = vmatpush.bf16.xpose.msra.mxu0 0
    %215 = vmatpush.bf16.xpose.msra.mxu0 0
    %216 = vmatpush.bf16.xpose.msra.mxu0 %v187
    %217 = vmatmul.bf16.gmra.mxu0 %v207
    %v218 = vpop.f32.mrf.mxu0
    %v219 = vadd.f32 0.0, %v218
    %v220 = vpop.f32.mrf.mxu0
    %v221 = vadd.f32 0.0, %v220
    %222 = vdwg.mxu0
    %v223 = vadd.f32 %v176, %v199
    %v224 = vadd.f32 %v177, %v201
    %v225 = vadd.f32 %v178, %v219
    %v226 = vadd.f32 %v179, %v221
    %vm227 = vcmask 23552
    %v228 = vsel %vm227, %v223, -inf
    %vm229 = vcmask 20480
    %v230 = vsel %vm229, %v224, -inf
    %v231 = vmax.f32 %v228, %v230
    %v232 = vrot.slane %v231, 4
    %v233 = vmax.f32 %v231, %v232
    %v234 = vrot.slane %v233, 2
    %v235 = vmax.f32 %v233, %v234
    %v236 = vrot.slane %v235, 1
    %v237 = vmax.f32 %v235, %v236
    %v238 = vsel %vm227, %v225, -inf
    %v239 = vsel %vm229, %v226, -inf
    %v240 = vmax.f32 %v238, %v239
    %v241 = vrot.slane %v240, 4
    %v242 = vmax.f32 %v240, %v241
    %v243 = vrot.slane %v242, 2
    %v244 = vmax.f32 %v242, %v243
    %v245 = vrot.slane %v244, 1
    %v246 = vmax.f32 %v244, %v245
    %v247 = vperm.slane %v39, 0
    %v248 = vadd.f32 %v237, %v247
    %v249 = vadd.f32 %v246, %v247
    %v250 = vmax.f32 %v248, 0.0
    %v251 = vmax.f32 %v249, 0.0
    %v252 = vperm.slane %v39, 1
    %v253 = vmul.f32 %v250, %v252
    %v254 = vmul.f32 %v251, %v252
    %v257 = vrot.slane %v254, 7
    %vm258 = vcmask 1041409
    %v259 = vsel %vm258, %v257, %v253
    %vm261 = vcmask 17408
    %v262 = vsel %vm261, %v259, 0.0
    %263 = vadd.xlane.f32.xlu0 %v262
    %v264 = vpop.xlane.xlu0 %263
    %v265 = vperm.slane %v39, 2
    %v266 = vadd.f32 %v264, %v265
    %v267 = vmul.f32 %v266, 0.5
    %v268 = vtanh.pop %v267
    %v269 = vmul.f32 %v268, 0.5
    %v270 = vadd.f32 %v269, 0.5
    %vm271 = vcmask 1024
    %272 = vst.msk [vmem:[%s3] sm:$0x3] %vm271, %v270
    // Predicated region
    $region18: #{tpu_custom_call.1} parent=1 // pred_check
      _
    $region19: #{tpu_custom_call.1} parent=1 // pred_check_branch
      %274 = sbr.rel (0) target = $region21
    $region20: #{tpu_custom_call.1} parent=1 // pred_region
      _
    $region21: #{tpu_custom_call.1} parent=1 // pred_fallthru
      _
    // Predicated region
    $region22: #{tpu_custom_call.1} parent=1 // pred_check
      _
    $region23: #{tpu_custom_call.1} parent=1 // pred_check_branch
      %276 = sbr.rel (0) target = $region25
    $region24: #{tpu_custom_call.1} parent=1 // pred_region
      _
    $region25: #{tpu_custom_call.1} parent=1 // pred_fallthru
      _
    %277 = vsyncpa [#allocation3], 1

</llo_original>
